<compile_context>
chip_gen: v7x
topology: tpu7x:2x2x1
jax: 0.10.0
libtpu: 0.0.40
codegen_flags: <defaults>
</compile_context>

<pallas_src>
import functools

import jax
import jax.numpy as jnp
from jax.experimental import pallas as pl
from jax.experimental.pallas import tpu as pltpu


def _round_up(x: int, m: int) -> int:
    return (x + m - 1) // m * m


def _pick_row_tile(n: int, row_tile: int) -> int:
    """Row tile: sublane-friendly, and >=2 tiles for moderate N (v7x 2-TC)."""
    n16 = _round_up(max(n, 1), 16)
    if n16 <= 16:
        return n16
    half = _round_up((n + 1) // 2, 16)   # ensures at least two row tiles
    return max(16, min(row_tile, half, n16))


def _ff_kernel(x_ref, gamma_ref, beta_ref, w1_ref, b1_ref, w2_ref, b2_ref,
               o_ref, *, eps: float, d_real: int, mask_cols: bool,
               silu_in_bf16: bool):
    f32 = jnp.float32

    # ---- LayerNorm (f32 VPU math) --------------------------------------
    x = x_ref[...].astype(f32)                                  # [tm, Dp]
    inv_d = 1.0 / d_real
    mean = jnp.sum(x, axis=-1, keepdims=True) * inv_d
    c = x - mean
    if mask_cols:
        # Padded feature columns were zero in x, but (x - mean) makes them
        # -mean; mask before the variance. Compiled out when D == Dp.
        col = jax.lax.broadcasted_iota(jnp.int32, x.shape, 1)
        c = jnp.where(col < d_real, c, 0.0)
    var = jnp.sum(c * c, axis=-1, keepdims=True) * inv_d
    xn = c * jax.lax.rsqrt(var + eps)
    xn = xn * gamma_ref[...] + beta_ref[...]                    # [tm, Dp]

    # ---- Linear 1 (bf16 MXU, f32 accumulate) + SiLU ---------------------
    h = jnp.dot(xn.astype(w1_ref.dtype), w1_ref[...],
                preferred_element_type=f32)
    h = h + b1_ref[...]                                         # [tm, Hp] f32
    if silu_in_bf16:
        # bf16 EUP/VPU path: enable on v6e / v7x only (not on v5e).
        hb = h.astype(jnp.bfloat16)
        act = hb * jax.nn.sigmoid(hb)
    else:
        act = (h * jax.nn.sigmoid(h)).astype(w2_ref.dtype)      # f32 SiLU
    # TODO(synk): training-mode dropout would mask `act` (and the output)
    # using pltpu.prng_seed / pltpu.prng_random_bits; identity in eval mode.

    # ---- Linear 2 (bf16 MXU, f32 accumulate) + bias ---------------------
    y = jnp.dot(act.astype(w2_ref.dtype), w2_ref[...],
                preferred_element_type=f32)
    o_ref[...] = (y + b2_ref[...]).astype(o_ref.dtype)


def prepare_ff_params(gamma, beta, w1, b1, w2, b2):
    """One-time parameter prep (pad to lane-dense shapes + bf16 weight cast).

    Hoisted off the per-call hot path so the forward pass does no extra
    HBM passes over the weights.
    """
    D, H = w1.shape
    Dp = _round_up(D, 128)
    Hp = _round_up(H, 128)
    f32, bf16 = jnp.float32, jnp.bfloat16
    params = {
        "D": D, "H": H, "Dp": Dp, "Hp": Hp,
        "gamma": jnp.pad(gamma.reshape(1, D).astype(f32), ((0, 0), (0, Dp - D))),
        "beta":  jnp.pad(beta.reshape(1, D).astype(f32), ((0, 0), (0, Dp - D))),
        "w1":    jnp.pad(w1.astype(bf16), ((0, Dp - D), (0, Hp - H))),
        "b1":    jnp.pad(b1.reshape(1, H).astype(f32), ((0, 0), (0, Hp - H))),
        "w2":    jnp.pad(w2.astype(bf16), ((0, Hp - H), (0, Dp - D))),
        "b2":    jnp.pad(b2.reshape(1, D).astype(f32), ((0, 0), (0, Dp - D))),
    }
    return params


def feed_forward(x, params, *, eps=1e-5, row_tile=256, silu_in_bf16=False):
    """x: [B, T, D] -> [B, T, D].  `params` from prepare_ff_params()."""
    B, T, D = x.shape
    assert D == params["D"], "feature dim mismatch with prepared params"
    H, Dp, Hp = params["H"], params["Dp"], params["Hp"]
    N = B * T

    tm = _pick_row_tile(N, row_tile)
    Np = _round_up(N, tm)

    # Fast path: skip padding / slicing when already aligned.
    x2 = x.reshape(N, D)
    padded = (Np != N) or (Dp != D)
    if padded:
        x2 = jnp.pad(x2, ((0, Np - N), (0, Dp - D)))

    # Rough VMEM footprint: double-buffered x/out tiles, resident bf16 weights
    # (counted x2 conservatively), small biases, f32 intermediates headroom.
    itm = x.dtype.itemsize
    est = (2 * tm * Dp * (itm + itm)            # x tile + out tile
           + 2 * 2 * (Dp * Hp + Hp * Dp)        # W1 + W2 (bf16)
           + 2 * 4 * (3 * Dp + Hp)              # gamma / beta / b1 / b2 (f32)
           + 4 * tm * Hp + 4 * tm * Dp)         # f32 h / xn intermediates
    # Cap at 40 MiB: safe headroom on v7x's 64 MiB per-TC VMEM.
    vmem_limit = max(32 << 20, min(int(1.4 * est), 40 << 20))

    kernel = functools.partial(
        _ff_kernel, eps=eps, d_real=D, mask_cols=(Dp != D),
        silu_in_bf16=silu_in_bf16)

    out2 = pl.pallas_call(
        kernel,
        out_shape=jax.ShapeDtypeStruct((Np, Dp), x.dtype),
        grid_spec=pltpu.PrefetchScalarGridSpec(
            num_scalar_prefetch=0,
            grid=(Np // tm,),
            in_specs=[
                pl.BlockSpec((tm, Dp), lambda i: (i, 0)),   # x rows
                pl.BlockSpec((1, Dp), lambda i: (0, 0)),    # gamma
                pl.BlockSpec((1, Dp), lambda i: (0, 0)),    # beta
                pl.BlockSpec((Dp, Hp), lambda i: (0, 0)),   # W1 (VMEM-resident)
                pl.BlockSpec((1, Hp), lambda i: (0, 0)),    # b1
                pl.BlockSpec((Hp, Dp), lambda i: (0, 0)),   # W2 (VMEM-resident)
                pl.BlockSpec((1, Dp), lambda i: (0, 0)),    # b2
            ],
            out_specs=pl.BlockSpec((tm, Dp), lambda i: (i, 0)),
        ),
        compiler_params=pltpu.CompilerParams(
            dimension_semantics=("parallel",),
            vmem_limit_bytes=vmem_limit),
    )(x2, params["gamma"], params["beta"], params["w1"], params["b1"],
      params["w2"], params["b2"])

    if padded:
        out2 = out2[:N, :D]
    return out2.reshape(B, T, D)


def _reference(x, gamma, beta, w1, b1, w2, b2, eps=1e-5):
    xf = x.astype(jnp.float32)
    mean = jnp.mean(xf, axis=-1, keepdims=True)
    var = jnp.mean((xf - mean) ** 2, axis=-1, keepdims=True)
    xn = (xf - mean) * jax.lax.rsqrt(var + eps) * gamma[0] + beta[0]
    h = xn @ w1 + b1[0]
    h = h * jax.nn.sigmoid(h)
    y = h @ w2 + b2[0]
    return y.astype(x.dtype)


if __name__ == "__main__":
    # Small shapes consistent with the module: d_model=32, expansion_factor=4.
    B, T, D = 2, 8, 32
    EXPANSION = 4
    H = D * EXPANSION

    key = jax.random.PRNGKey(0)
    kx, kw1, kb1, kw2, kb2 = jax.random.split(key, 5)

    x = jax.random.normal(kx, (B, T, D), dtype=jnp.float32)

    # Deterministic parameter init (LayerNorm: gamma=1, beta=0; Linears: normal).
    gamma = jnp.ones((1, D), dtype=jnp.float32)
    beta = jnp.zeros((1, D), dtype=jnp.float32)
    w1 = jax.random.normal(kw1, (D, H), dtype=jnp.float32) * (1.0 / D) ** 0.5
    b1 = jax.random.normal(kb1, (1, H), dtype=jnp.float32) * 0.01
    w2 = jax.random.normal(kw2, (H, D), dtype=jnp.float32) * (1.0 / H) ** 0.5
    b2 = jax.random.normal(kb2, (1, D), dtype=jnp.float32) * 0.01

    # One-time parameter prep (pad + bf16 cast hoisted off the hot path).
    params = prepare_ff_params(gamma, beta, w1, b1, w2, b2)

    out = feed_forward(x, params)
    out = jax.block_until_ready(out)

    ref = _reference(x, gamma, beta, w1, b1, w2, b2)
    assert out.shape == (B, T, D)
    # bf16 MXU operands (f32 accumulation) -> allow ~1e-2-level deviation.
    max_err = float(jnp.max(jnp.abs(out - ref)))
    assert jnp.allclose(out, ref, atol=3e-2, rtol=3e-2), (
        f"mismatch vs reference (max abs err {max_err})")

    print("KERNEL_OK")
</pallas_src>

<mosaic_0001>
module attributes {stable_mosaic.version = 11 : i64} {
  func.func @_ff_kernel(%arg0: i32, %arg1: memref<16x128xf32, #tpu.memory_space<vmem>>, %arg2: memref<1x128xf32, #tpu.memory_space<vmem>>, %arg3: memref<1x128xf32, #tpu.memory_space<vmem>>, %arg4: memref<128x128xbf16, #tpu.memory_space<vmem>>, %arg5: memref<1x128xf32, #tpu.memory_space<vmem>>, %arg6: memref<128x128xbf16, #tpu.memory_space<vmem>>, %arg7: memref<1x128xf32, #tpu.memory_space<vmem>>, %arg8: memref<16x128xf32, #tpu.memory_space<vmem>>) attributes {dimension_semantics = [#tpu.dimension_semantics<parallel>], iteration_bounds = array<i64: 1>, scalar_prefetch = 0 : i64, scratch_operands = 0 : i64, tpu.core_type = #tpu.core_type<tc>, window_params = [{transform_indices = @transform_0, window_bounds = array<i64: 16, 128>}, {pipeline_mode = #tpu.pipeline_mode<synchronous>, transform_indices = @transform_1, window_bounds = array<i64: 1, 128>}, {pipeline_mode = #tpu.pipeline_mode<synchronous>, transform_indices = @transform_2, window_bounds = array<i64: 1, 128>}, {pipeline_mode = #tpu.pipeline_mode<synchronous>, transform_indices = @transform_3, window_bounds = array<i64: 128, 128>}, {pipeline_mode = #tpu.pipeline_mode<synchronous>, transform_indices = @transform_4, window_bounds = array<i64: 1, 128>}, {pipeline_mode = #tpu.pipeline_mode<synchronous>, transform_indices = @transform_5, window_bounds = array<i64: 128, 128>}, {pipeline_mode = #tpu.pipeline_mode<synchronous>, transform_indices = @transform_6, window_bounds = array<i64: 1, 128>}, {transform_indices = @transform_7, window_bounds = array<i64: 16, 128>}]} {
    %c0 = arith.constant 0 : index
    %c0_0 = arith.constant 0 : index
    %0 = vector.load %arg1[%c0, %c0_0] : memref<16x128xf32, #tpu.memory_space<vmem>>, vector<16x128xf32>
    %cst = arith.constant dense<0.000000e+00> : vector<16xf32>
    %1 = vector.multi_reduction <add>, %0, %cst [1] : vector<16x128xf32> to vector<16xf32>
    %2 = vector.shape_cast %1 : vector<16xf32> to vector<16x1xf32>
    %cst_1 = arith.constant 3.125000e-02 : f32
    %3 = vector.broadcast %cst_1 : f32 to vector<16x1xf32>
    %4 = arith.mulf %2, %3 : vector<16x1xf32>
    %5 = vector.broadcast %4 : vector<16x1xf32> to vector<16x128xf32>
    %6 = arith.subf %0, %5 : vector<16x128xf32>
    %7 = tpu.iota {dimensions = array<i32: 1>} : vector<16x128xi32>
    %c32_i32 = arith.constant 32 : i32
    %8 = vector.broadcast %c32_i32 : i32 to vector<16x128xi32>
    %9 = arith.cmpi slt, %7, %8 : vector<16x128xi32>
    %cst_2 = arith.constant 0.000000e+00 : f32
    %10 = vector.broadcast %cst_2 : f32 to vector<16x128xf32>
    %11 = arith.select %9, %6, %10 : vector<16x128xi1>, vector<16x128xf32>
    %12 = arith.mulf %11, %11 : vector<16x128xf32>
    %cst_3 = arith.constant dense<0.000000e+00> : vector<16xf32>
    %13 = vector.multi_reduction <add>, %12, %cst_3 [1] : vector<16x128xf32> to vector<16xf32>
    %14 = vector.shape_cast %13 : vector<16xf32> to vector<16x1xf32>
    %cst_4 = arith.constant 3.125000e-02 : f32
    %15 = vector.broadcast %cst_4 : f32 to vector<16x1xf32>
    %16 = arith.mulf %14, %15 : vector<16x1xf32>
    %cst_5 = arith.constant 9.99999974E-6 : f32
    %17 = vector.broadcast %cst_5 : f32 to vector<16x1xf32>
    %18 = arith.addf %16, %17 : vector<16x1xf32>
    %19 = math.rsqrt %18 : vector<16x1xf32>
    %20 = vector.broadcast %19 : vector<16x1xf32> to vector<16x128xf32>
    %21 = arith.mulf %11, %20 : vector<16x128xf32>
    %c0_6 = arith.constant 0 : index
    %c0_7 = arith.constant 0 : index
    %22 = vector.load %arg2[%c0_6, %c0_7] : memref<1x128xf32, #tpu.memory_space<vmem>>, vector<1x128xf32>
    %23 = vector.broadcast %22 : vector<1x128xf32> to vector<16x128xf32>
    %24 = arith.mulf %21, %23 : vector<16x128xf32>
    %c0_8 = arith.constant 0 : index
    %c0_9 = arith.constant 0 : index
    %25 = vector.load %arg3[%c0_8, %c0_9] : memref<1x128xf32, #tpu.memory_space<vmem>>, vector<1x128xf32>
    %26 = vector.broadcast %25 : vector<1x128xf32> to vector<16x128xf32>
    %27 = arith.addf %24, %26 : vector<16x128xf32>
    %28 = arith.truncf %27 : vector<16x128xf32> to vector<16x128xbf16>
    %c0_10 = arith.constant 0 : index
    %c0_11 = arith.constant 0 : index
    %29 = vector.load %arg4[%c0_10, %c0_11] : memref<128x128xbf16, #tpu.memory_space<vmem>>, vector<128x128xbf16>
    %cst_12 = arith.constant dense<0.000000e+00> : vector<16x128xf32>
    %30 = tpu.matmul %28, %29, %cst_12 {dimension_numbers = #tpu.dot_dimension_numbers<[1], [0], [0], [1], [0, 0, 1, 1], [], []>} : vector<16x128xbf16>, vector<128x128xbf16>, vector<16x128xf32> -> vector<16x128xf32>
    %c0_13 = arith.constant 0 : index
    %c0_14 = arith.constant 0 : index
    %31 = vector.load %arg5[%c0_13, %c0_14] : memref<1x128xf32, #tpu.memory_space<vmem>>, vector<1x128xf32>
    %32 = vector.broadcast %31 : vector<1x128xf32> to vector<16x128xf32>
    %33 = arith.addf %30, %32 : vector<16x128xf32>
    %34 = arith.negf %33 : vector<16x128xf32>
    %35 = math.exp %34 : vector<16x128xf32>
    %cst_15 = arith.constant 1.000000e+00 : f32
    %36 = vector.broadcast %cst_15 : f32 to vector<16x128xf32>
    %37 = arith.addf %36, %35 : vector<16x128xf32>
    %38 = arith.divf %36, %37 : vector<16x128xf32>
    %39 = arith.mulf %33, %38 : vector<16x128xf32>
    %40 = arith.truncf %39 : vector<16x128xf32> to vector<16x128xbf16>
    %c0_16 = arith.constant 0 : index
    %c0_17 = arith.constant 0 : index
    %41 = vector.load %arg6[%c0_16, %c0_17] : memref<128x128xbf16, #tpu.memory_space<vmem>>, vector<128x128xbf16>
    %cst_18 = arith.constant dense<0.000000e+00> : vector<16x128xf32>
    %42 = tpu.matmul %40, %41, %cst_18 {dimension_numbers = #tpu.dot_dimension_numbers<[1], [0], [0], [1], [0, 0, 1, 1], [], []>} : vector<16x128xbf16>, vector<128x128xbf16>, vector<16x128xf32> -> vector<16x128xf32>
    %c0_19 = arith.constant 0 : index
    %c0_20 = arith.constant 0 : index
    %43 = vector.load %arg7[%c0_19, %c0_20] : memref<1x128xf32, #tpu.memory_space<vmem>>, vector<1x128xf32>
    %44 = vector.broadcast %43 : vector<1x128xf32> to vector<16x128xf32>
    %45 = arith.addf %42, %44 : vector<16x128xf32>
    %c0_21 = arith.constant 0 : index
    %c0_22 = arith.constant 0 : index
    %46 = vector.load %arg8[%c0_21, %c0_22] : memref<16x128xf32, #tpu.memory_space<vmem>>, vector<16x128xf32>
    tpu.vector_store %arg8[%c0_21, %c0_22], %45 {strides = array<i32>} : memref<16x128xf32, #tpu.memory_space<vmem>>, vector<16x128xf32>,
    return
  }
  func.func @transform_0(%arg0: i32) -> (i32, i32) {
    %c0_i32 = arith.constant 0 : i32
    %c0_i32_0 = arith.constant 0 : i32
    return %arg0, %c0_i32 : i32, i32
  }
  func.func @transform_1(%arg0: i32) -> (i32, i32) {
    %c0_i32 = arith.constant 0 : i32
    %c0_i32_0 = arith.constant 0 : i32
    %c0_i32_1 = arith.constant 0 : i32
    return %c0_i32, %c0_i32_0 : i32, i32
  }
  func.func @transform_2(%arg0: i32) -> (i32, i32) {
    %c0_i32 = arith.constant 0 : i32
    %c0_i32_0 = arith.constant 0 : i32
    %c0_i32_1 = arith.constant 0 : i32
    return %c0_i32, %c0_i32_0 : i32, i32
  }
  func.func @transform_3(%arg0: i32) -> (i32, i32) {
    %c0_i32 = arith.constant 0 : i32
    %c0_i32_0 = arith.constant 0 : i32
    %c0_i32_1 = arith.constant 0 : i32
    return %c0_i32, %c0_i32_0 : i32, i32
  }
  func.func @transform_4(%arg0: i32) -> (i32, i32) {
    %c0_i32 = arith.constant 0 : i32
    %c0_i32_0 = arith.constant 0 : i32
    %c0_i32_1 = arith.constant 0 : i32
    return %c0_i32, %c0_i32_0 : i32, i32
  }
  func.func @transform_5(%arg0: i32) -> (i32, i32) {
    %c0_i32 = arith.constant 0 : i32
    %c0_i32_0 = arith.constant 0 : i32
    %c0_i32_1 = arith.constant 0 : i32
    return %c0_i32, %c0_i32_0 : i32, i32
  }
  func.func @transform_6(%arg0: i32) -> (i32, i32) {
    %c0_i32 = arith.constant 0 : i32
    %c0_i32_0 = arith.constant 0 : i32
    %c0_i32_1 = arith.constant 0 : i32
    return %c0_i32, %c0_i32_0 : i32, i32
  }
  func.func @transform_7(%arg0: i32) -> (i32, i32) {
    %c0_i32 = arith.constant 0 : i32
    %c0_i32_0 = arith.constant 0 : i32
    return %arg0, %c0_i32 : i32, i32
  }
}

</mosaic_0001>

<llo_original>
// kernel: tpu_custom_call.1
$region0: #{tpu_custom_call.1}
  #allocation0 [shape = 'u32[]', space=smem, size = 0x4, offset = 0x4, fixed_abs, tag = 'smem constant byte address 0x4 - core index']
  #allocation1 [shape = 'u32[144,128]{1,0:T(1,128)}', space=vmem, size = 0x12000, scoped, tag = 'internal scratch']
  %s0 = inlined_call_operand.hbm [shape: f32[16,128], index: 0, kind: input, shape index: {}]
  %s1 = inlined_call_operand.vmem [shape: f32[1,128], index: 1, kind: input, shape index: {}]
  %s2 = inlined_call_operand.vmem [shape: f32[1,128], index: 2, kind: input, shape index: {}]
  %s3 = inlined_call_operand.hbm [shape: bf16[128,128], index: 3, kind: input, shape index: {}]
  %s4 = inlined_call_operand.vmem [shape: f32[1,128], index: 4, kind: input, shape index: {}]
  %s5 = inlined_call_operand.hbm [shape: bf16[128,128], index: 5, kind: input, shape index: {}]
  %s6 = inlined_call_operand.vmem [shape: f32[1,128], index: 6, kind: input, shape index: {}]
  %s7 = inlined_call_operand.hbm [shape: f32[16,128], index: 7, kind: output, shape index: {}]
  %s8 = sld [smem:[#allocation0]]
  $region50: #{tpu_custom_call.1} parent=0
    _
  %s10 = ssub.s32 1, %s8
  %s11 = scalar_select 0, %s10, %s8
  $region1: #{tpu_custom_call.1} parent=0
    #allocation2 [shape = 'u8[8192]{0}', space=vmem, size = 0x2000, scoped, tag = 'input window, operand 0, single buffered']
    #allocation3 [shape = 's32[1]{0}', space=sflag, size = 0x4, scoped, tag = 'scoped memory for tpu_custom_call.1']
    #allocation4 [shape = 's32[1]{0}', space=sflag, size = 0x4, scoped, tag = 'scoped memory for tpu_custom_call.1']
    #allocation5 [shape = 'u8[32768]{0}', space=vmem, size = 0x8000, scoped, tag = 'input window, operand 3, single buffered']
    #allocation6 [shape = 's32[1]{0}', space=sflag, size = 0x4, scoped, tag = 'scoped memory for tpu_custom_call.1']
    #allocation7 [shape = 'u8[32768]{0}', space=vmem, size = 0x8000, scoped, tag = 'input window, operand 5, single buffered']
    #allocation8 [shape = 'u8[8192]{0}', space=vmem, size = 0x2000, scoped, tag = 'output window, operand 0, single buffered']
    %12 = vsyncpa [#allocation3], 0
    %13 = vsyncpa [#allocation6], 0
    %14 = vsyncpa [#allocation4], 0
    // Predicated region
    $region2: #{tpu_custom_call.1} parent=1 // pred_check
      _
    $region3: #{tpu_custom_call.1} parent=1 // pred_check_branch
      %16 = sbr.rel (0) target = $region5
    $region4: #{tpu_custom_call.1} parent=1 // pred_region
      %s18 = ssub.s32 256, 256
      %19 = vsyncadd [#allocation3], %s18
      %s20 = sshll.u32 [#allocation2], 4
      %s21 = int_to_ptr.vmem [resolvable:$true] %s20
      %26 = dma.hbm_to_vmem [thread:$0]  %s0, 256, %s21, [#allocation3], 128, 128, 8
    $region5: #{tpu_custom_call.1} parent=1 // pred_fallthru
      _
    // Predicated region
    $region6: #{tpu_custom_call.1} parent=1 // pred_check
      _
    $region7: #{tpu_custom_call.1} parent=1 // pred_check_branch
      %28 = sbr.rel (0) target = $region9
    $region8: #{tpu_custom_call.1} parent=1 // pred_region
      _
    $region9: #{tpu_custom_call.1} parent=1 // pred_fallthru
      _
    // Predicated region
    $region10: #{tpu_custom_call.1} parent=1 // pred_check
      _
    $region11: #{tpu_custom_call.1} parent=1 // pred_check_branch
      %30 = sbr.rel (0) target = $region13
    $region12: #{tpu_custom_call.1} parent=1 // pred_region
      _
    $region13: #{tpu_custom_call.1} parent=1 // pred_fallthru
      _
    // Predicated region
    $region14: #{tpu_custom_call.1} parent=1 // pred_check
      _
    $region15: #{tpu_custom_call.1} parent=1 // pred_check_branch
      %32 = sbr.rel (0) target = $region17
    $region16: #{tpu_custom_call.1} parent=1 // pred_region
      %s34 = ssub.s32 1024, 1024
      %35 = vsyncadd [#allocation6], %s34
      %s36 = sshll.u32 [#allocation5], 4
      %s37 = int_to_ptr.vmem [resolvable:$true] %s36
      %42 = dma.hbm_to_vmem [thread:$0]  %s3, 1024, %s37, [#allocation6], 64, 64, 4
    $region17: #{tpu_custom_call.1} parent=1 // pred_fallthru
      _
    // Predicated region
    $region18: #{tpu_custom_call.1} parent=1 // pred_check
      _
    $region19: #{tpu_custom_call.1} parent=1 // pred_check_branch
      %44 = sbr.rel (0) target = $region21
    $region20: #{tpu_custom_call.1} parent=1 // pred_region
      _
    $region21: #{tpu_custom_call.1} parent=1 // pred_fallthru
      _
    // Predicated region
    $region22: #{tpu_custom_call.1} parent=1 // pred_check
      _
    $region23: #{tpu_custom_call.1} parent=1 // pred_check_branch
      %46 = sbr.rel (0) target = $region25
    $region24: #{tpu_custom_call.1} parent=1 // pred_region
      %s48 = ssub.s32 1024, 1024
      %49 = vsyncadd [#allocation6], %s48
      %s50 = sshll.u32 [#allocation7], 4
      %s51 = int_to_ptr.vmem [resolvable:$true] %s50
      %56 = dma.hbm_to_vmem [thread:$0]  %s5, 1024, %s51, [#allocation6], 64, 64, 4
    $region25: #{tpu_custom_call.1} parent=1 // pred_fallthru
      _
    // Predicated region
    $region26: #{tpu_custom_call.1} parent=1 // pred_check
      _
    $region27: #{tpu_custom_call.1} parent=1 // pred_check_branch
      %58 = sbr.rel (0) target = $region29
    $region28: #{tpu_custom_call.1} parent=1 // pred_region
      _
    $region29: #{tpu_custom_call.1} parent=1 // pred_fallthru
      _
    // Predicated region
    $region30: #{tpu_custom_call.1} parent=1 // pred_check
      _
    $region31: #{tpu_custom_call.1} parent=1 // pred_check_branch
      %60 = sbr.rel (0) target = $region33
    $region32: #{tpu_custom_call.1} parent=1 // pred_region
      %61 = dma.done [#allocation3], 256
    $region33: #{tpu_custom_call.1} parent=1 // pred_fallthru
      _
    // Predicated region
    $region34: #{tpu_custom_call.1} parent=1 // pred_check
      _
    $region35: #{tpu_custom_call.1} parent=1 // pred_check_branch
      %63 = sbr.rel (0) target = $region37
    $region36: #{tpu_custom_call.1} parent=1 // pred_region
      %64 = dma.done [#allocation6], 1024
    $region37: #{tpu_custom_call.1} parent=1 // pred_fallthru
      _
    // Predicated region
    $region38: #{tpu_custom_call.1} parent=1 // pred_check
      _
    $region39: #{tpu_custom_call.1} parent=1 // pred_check_branch
      %66 = sbr.rel (0) target = $region41
    $region40: #{tpu_custom_call.1} parent=1 // pred_region
      %67 = dma.done [#allocation6], 1024
    $region41: #{tpu_custom_call.1} parent=1 // pred_fallthru
      _
    %v69 = vld [vmem:[#allocation2] sm:$0xff]
    %v70 = vld [vmem:[#allocation2 + $0x8] sm:$0xff]
    %71 = vadd.xlane.f32.xlu0 %v69
    %v72 = vpop.xlane.xlu0 %71
    %73 = vadd.xlane.f32.xlu0 %v70
    %v74 = vpop.xlane.xlu0 %73
    %v75 = vmul.f32 %v72, 0.03125
    %v76 = vmul.f32 %v74, 0.03125
    %v77 = vsub.f32 %v69, %v75
    %v78 = vsub.f32 %v70, %v76
    %v79 = vlaneseq
    %v80 = vand.u32 %v79, 127
    %vm81 = vcmp.lt.s32.totalorder %v80, 32
    %v82 = vsel %vm81, %v77, 0.0
    %v83 = vsel %vm81, %v78, 0.0
    %v84 = vmul.f32 %v82, %v82
    %v85 = vmul.f32 %v83, %v83
    %86 = vadd.xlane.f32.xlu0 %v84
    %v87 = vpop.xlane.xlu0 %86
    %88 = vadd.xlane.f32.xlu0 %v85
    %v89 = vpop.xlane.xlu0 %88
    %v90 = vmul.f32 %v87, 0.03125
    %v91 = vmul.f32 %v89, 0.03125
    %v92 = vadd.f32 %v90, 1e-05
    %v93 = vadd.f32 %v91, 1e-05
    %v94 = vrsqrt.pop %v92
    %v95 = vrsqrt.pop %v93
    %v96 = vmul.f32 %v82, %v94
    %v97 = vmul.f32 %v83, %v95
    %v98 = vld [vmem:[%s1] sm:$0x1]
    %v100 = vlaneseq
    %v101 = vshrl.u32 %v100, 7
    %v102 = vsub.s32 0, %v101
    %v103 = vrot.slane %v98, %v102
    %v105 = vmul.f32 %v96, %v103
    %v106 = vmul.f32 %v97, %v103
    %v107 = vld [vmem:[%s2] sm:$0x1]
    %v109 = vlaneseq
    %v110 = vshrl.u32 %v109, 7
    %v111 = vsub.s32 0, %v110
    %v112 = vrot.slane %v107, %v111
    %v114 = vadd.f32 %v105, %v112
    %v115 = vadd.f32 %v106, %v112
    %v116 = vpack.c.bf16 %v115, %v114
    %v117 = vld [vmem:[#allocation5] sm:$0xf]
    %v118 = vld [vmem:[#allocation5 + $0x4] sm:$0xf]
    %v119 = vld [vmem:[#allocation5 + $0x8] sm:$0xf]
    %v120 = vld [vmem:[#allocation5 + $0xc] sm:$0xf]
    %v121 = vld [vmem:[#allocation5 + $0x10] sm:$0xf]
    %v122 = vld [vmem:[#allocation5 + $0x14] sm:$0xf]
    %v123 = vld [vmem:[#allocation5 + $0x18] sm:$0xf]
    %v124 = vld [vmem:[#allocation5 + $0x1c] sm:$0xf]
    %v125 = vld [vmem:[#allocation5 + $0x20] sm:$0xf]
    %v126 = vld [vmem:[#allocation5 + $0x24] sm:$0xf]
    %v127 = vld [vmem:[#allocation5 + $0x28] sm:$0xf]
    %v128 = vld [vmem:[#allocation5 + $0x2c] sm:$0xf]
    %v129 = vld [vmem:[#allocation5 + $0x30] sm:$0xf]
    %v130 = vld [vmem:[#allocation5 + $0x34] sm:$0xf]
    %v131 = vld [vmem:[#allocation5 + $0x38] sm:$0xf]
    %v132 = vld [vmem:[#allocation5 + $0x3c] sm:$0xf]
    %v133 = vld [vmem:[%s4] sm:$0x1]
    %v135 = vlaneseq
    %v136 = vshrl.u32 %v135, 7
    %v137 = vsub.s32 0, %v136
    %v138 = vrot.slane %v133, %v137
    %v156 = vunpack.c.l.b16 %v117
    %v157 = vunpack.c.l.b16 %v118
    %v158 = vunpack.c.l.b16 %v119
    %v159 = vunpack.c.l.b16 %v120
    %v160 = vunpack.c.l.b16 %v121
    %v161 = vunpack.c.l.b16 %v122
    %v162 = vunpack.c.l.b16 %v123
    %v163 = vunpack.c.l.b16 %v124
    %v164 = vunpack.c.l.b16 %v125
    %v165 = vunpack.c.l.b16 %v126
    %v166 = vunpack.c.l.b16 %v127
    %v167 = vunpack.c.l.b16 %v128
    %v168 = vunpack.c.l.b16 %v129
    %v169 = vunpack.c.l.b16 %v130
    %v170 = vunpack.c.l.b16 %v131
    %v171 = vunpack.c.l.b16 %v132
    %v172 = vpack.c.b16 %v157, %v156
    %v173 = vpack.c.b16 %v159, %v158
    %v174 = vpack.c.b16 %v161, %v160
    %v175 = vpack.c.b16 %v163, %v162
    %v176 = vpack.c.b16 %v165, %v164
    %v177 = vpack.c.b16 %v167, %v166
    %v178 = vpack.c.b16 %v169, %v168
    %v179 = vpack.c.b16 %v171, %v170
    %188 = vmatprep.subr.bf16.mxu0 0
    %189 = vmatpush1.bf16.msra.mxu0 %v172
    %190 = vmatprep.subr.bf16.mxu0 0
    %191 = vmatpush1.bf16.msra.mxu0 %v173
    %192 = vmatprep.subr.bf16.mxu0 0
    %193 = vmatpush1.bf16.msra.mxu0 %v174
    %194 = vmatprep.subr.bf16.mxu0 0
    %195 = vmatpush1.bf16.msra.mxu0 %v175
    %196 = vmatprep.subr.bf16.mxu0 0
    %197 = vmatpush1.bf16.msra.mxu0 %v176
    %198 = vmatprep.subr.bf16.mxu0 0
    %199 = vmatpush1.bf16.msra.mxu0 %v177
    %200 = vmatprep.subr.bf16.mxu0 0
    %201 = vmatpush1.bf16.msra.mxu0 %v178
    %202 = vmatprep.subr.bf16.mxu0 0
    %203 = vmatpush1.bf16.msra.mxu0 %v179
    %204 = vmatprep.subr.bf16.mxu0 0
    %205 = vmatpush1.bf16.msra.mxu0 0
    %206 = vmatprep.subr.bf16.mxu0 0
    %207 = vmatpush1.bf16.msra.mxu0 0
    %208 = vmatprep.subr.bf16.mxu0 0
    %209 = vmatpush1.bf16.msra.mxu0 0
    %210 = vmatprep.subr.bf16.mxu0 0
    %211 = vmatpush1.bf16.msra.mxu0 0
    %212 = vmatprep.subr.bf16.mxu0 0
    %213 = vmatpush1.bf16.msra.mxu0 0
    %214 = vmatprep.subr.bf16.mxu0 0
    %215 = vmatpush1.bf16.msra.mxu0 0
    %216 = vmatprep.subr.bf16.mxu0 0
    %217 = vmatpush1.bf16.msra.mxu0 0
    %218 = vmatprep.subr.bf16.mxu0 0
    %219 = vmatpush1.bf16.msra.mxu0 0
    %220 = vmatprep.mubr.bf16.mxu0 0
    %221 = vmatmul.mubr.bf16.gmra.mrb[0].mxu0 %v116
    %v222 = vpop.f32.mrb[0].mxu0
    %v223 = vadd.f32 %v138, %v222
    %v224 = vpop.f32.mrb[0].mxu0
    %v225 = vpop.f32.mrb[0].mxu0
    %v226 = vadd.f32 %v138, %v225
    %v227 = vpop.f32.mrb[0].mxu0
    %228 = vdwg.mxu0
    %v229 = vxor.u32 %v223, 2147483648
    %v230 = vxor.u32 %v226, 2147483648
    %v231 = vmul.f32 %v229, 1.442695
    %v232 = vpow.pop %v231
    %v233 = vmul.f32 %v230, 1.442695
    %v234 = vpow.pop %v233
    %v235 = vadd.f32 %v232, 1.0
    %v236 = vadd.f32 %v234, 1.0
    %v237 = vrcp.pop %v235
    %v238 = vmul.f32 1.0, %v237
    %v239 = vrcp.pop %v236
    %v240 = vmul.f32 1.0, %v239
    %v241 = vmul.f32 %v223, %v238
    %v242 = vmul.f32 %v226, %v240
    %v243 = vpack.c.bf16 %v242, %v241
    %v244 = vld [vmem:[#allocation7] sm:$0xf]
    %v245 = vld [vmem:[#allocation7 + $0x4] sm:$0xf]
    %v246 = vld [vmem:[#allocation7 + $0x8] sm:$0xf]
    %v247 = vld [vmem:[#allocation7 + $0xc] sm:$0xf]
    %v248 = vld [vmem:[#allocation7 + $0x10] sm:$0xf]
    %v249 = vld [vmem:[#allocation7 + $0x14] sm:$0xf]
    %v250 = vld [vmem:[#allocation7 + $0x18] sm:$0xf]
    %v251 = vld [vmem:[#allocation7 + $0x1c] sm:$0xf]
    %v252 = vld [vmem:[#allocation7 + $0x20] sm:$0xf]
    %v253 = vld [vmem:[#allocation7 + $0x24] sm:$0xf]
    %v254 = vld [vmem:[#allocation7 + $0x28] sm:$0xf]
    %v255 = vld [vmem:[#allocation7 + $0x2c] sm:$0xf]
    %v256 = vld [vmem:[#allocation7 + $0x30] sm:$0xf]
    %v257 = vld [vmem:[#allocation7 + $0x34] sm:$0xf]
    %v258 = vld [vmem:[#allocation7 + $0x38] sm:$0xf]
    %v259 = vld [vmem:[#allocation7 + $0x3c] sm:$0xf]
    %v260 = vld [vmem:[%s6] sm:$0x1]
    %v262 = vlaneseq
    %v263 = vshrl.u32 %v262, 7
    %v264 = vsub.s32 0, %v263
    %v265 = vrot.slane %v260, %v264
    %v283 = vunpack.c.l.b16 %v244
    %v284 = vunpack.c.l.b16 %v245
    %v285 = vunpack.c.l.b16 %v246
    %v286 = vunpack.c.l.b16 %v247
    %v287 = vunpack.c.l.b16 %v248
    %v288 = vunpack.c.l.b16 %v249
    %v289 = vunpack.c.l.b16 %v250
    %v290 = vunpack.c.l.b16 %v251
    %v291 = vunpack.c.l.b16 %v252
    %v292 = vunpack.c.l.b16 %v253
    %v293 = vunpack.c.l.b16 %v254
    %v294 = vunpack.c.l.b16 %v255
    %v295 = vunpack.c.l.b16 %v256
    %v296 = vunpack.c.l.b16 %v257
    %v297 = vunpack.c.l.b16 %v258
    %v298 = vunpack.c.l.b16 %v259
    %v299 = vpack.c.b16 %v284, %v283
    %v300 = vpack.c.b16 %v286, %v285
    %v301 = vpack.c.b16 %v288, %v287
    %v302 = vpack.c.b16 %v290, %v289
    %v303 = vpack.c.b16 %v292, %v291
    %v304 = vpack.c.b16 %v294, %v293
    %v305 = vpack.c.b16 %v296, %v295
    %v306 = vpack.c.b16 %v298, %v297
    %315 = vmatprep.subr.bf16.mxu0 0
    %316 = vmatpush1.bf16.msra.mxu0 %v299
    %317 = vmatprep.subr.bf16.mxu0 0
    %318 = vmatpush1.bf16.msra.mxu0 %v300
    %319 = vmatprep.subr.bf16.mxu0 0
    %320 = vmatpush1.bf16.msra.mxu0 %v301
    %321 = vmatprep.subr.bf16.mxu0 0
    %322 = vmatpush1.bf16.msra.mxu0 %v302
    %323 = vmatprep.subr.bf16.mxu0 0
    %324 = vmatpush1.bf16.msra.mxu0 %v303
    %325 = vmatprep.subr.bf16.mxu0 0
    %326 = vmatpush1.bf16.msra.mxu0 %v304
    %327 = vmatprep.subr.bf16.mxu0 0
    %328 = vmatpush1.bf16.msra.mxu0 %v305
    %329 = vmatprep.subr.bf16.mxu0 0
    %330 = vmatpush1.bf16.msra.mxu0 %v306
    %331 = vmatprep.subr.bf16.mxu0 0
    %332 = vmatpush1.bf16.msra.mxu0 0
    %333 = vmatprep.subr.bf16.mxu0 0
    %334 = vmatpush1.bf16.msra.mxu0 0
    %335 = vmatprep.subr.bf16.mxu0 0
    %336 = vmatpush1.bf16.msra.mxu0 0
    %337 = vmatprep.subr.bf16.mxu0 0
    %338 = vmatpush1.bf16.msra.mxu0 0
    %339 = vmatprep.subr.bf16.mxu0 0
    %340 = vmatpush1.bf16.msra.mxu0 0
    %341 = vmatprep.subr.bf16.mxu0 0
    %342 = vmatpush1.bf16.msra.mxu0 0
    %343 = vmatprep.subr.bf16.mxu0 0
    %344 = vmatpush1.bf16.msra.mxu0 0
    %345 = vmatprep.subr.bf16.mxu0 0
    %346 = vmatpush1.bf16.msra.mxu0 0
    %347 = vmatprep.mubr.bf16.mxu0 0
    %348 = vmatmul.mubr.bf16.gmra.mrb[0].mxu0 %v243
    %v349 = vpop.f32.mrb[0].mxu0
    %v350 = vadd.f32 %v265, %v349
    %v351 = vpop.f32.mrb[0].mxu0
    %v352 = vpop.f32.mrb[0].mxu0
    %v353 = vadd.f32 %v265, %v352
    %v354 = vpop.f32.mrb[0].mxu0
    %355 = vdwg.mxu0
    %356 = vst [vmem:[#allocation8] sm:$0xff] %v350
    %357 = vst [vmem:[#allocation8 + $0x8] sm:$0xff] %v353
    // Predicated region
    $region42: #{tpu_custom_call.1} parent=1 // pred_check
      _
    $region43: #{tpu_custom_call.1} parent=1 // pred_check_branch
      %359 = sbr.rel (0) target = $region45
    $region44: #{tpu_custom_call.1} parent=1 // pred_region
      %s361 = ssub.s32 256, 256
      %362 = vsyncadd [#allocation4], %s361
      %s363 = sshll.u32 [#allocation8], 4
      %s364 = int_to_ptr.vmem [resolvable:$true] %s363
      %369 = dma.vmem_to_hbm [thread:$0]  %s364, 256, %s7, [#allocation4], 128, 128, 8
    $region45: #{tpu_custom_call.1} parent=1 // pred_fallthru
      _
    // Predicated region
    $region46: #{tpu_custom_call.1} parent=1 // pred_check
      _
    $region47: #{tpu_custom_call.1} parent=1 // pred_check_branch
      %371 = sbr.rel (0) target = $region49
    $region48: #{tpu_custom_call.1} parent=1 // pred_region
      %372 = dma.done [#allocation4], 256
    $region49: #{tpu_custom_call.1} parent=1 // pred_fallthru
      _
    %373 = vsyncpa [#allocation3], 1
    %374 = vsyncpa [#allocation6], 1
    %375 = vsyncpa [#allocation4], 1

</llo_original>
